<compile_context>
chip_gen: v5e
topology: v5e:2x2
jax: 0.10.0
libtpu: 0.0.40
codegen_flags: <defaults>
</compile_context>

<pallas_src>
import functools
import math

import jax
import jax.numpy as jnp
from jax.experimental import pallas as pl
from jax.experimental.pallas import tpu as pltpu

D_MODEL = 4
SEQ_LEN = 4
DROPOUT_P = 0.1

_TARGET_BLOCK_BYTES = 2 * 1024 * 1024      # ~2 MiB of x per block
_VMEM_LIMIT_BYTES = 48 * 1024 * 1024       # < v7x's 64 MiB physical VMEM


def make_positional_encoding(seq_len: int, d_model: int) -> jnp.ndarray:
    """Deterministic sinusoidal PE table, shape (seq_len, d_model), float32."""
    position = jnp.arange(seq_len, dtype=jnp.float32)[:, None]                  # (S, 1)
    div_term = jnp.exp(
        jnp.arange(0, d_model, 2, dtype=jnp.float32) * (-math.log(10000.0) / d_model)
    )                                                                            # (D//2,)
    ang = position * div_term                                                    # (S, D//2)
    pe = jnp.zeros((seq_len, d_model), dtype=jnp.float32)
    pe = pe.at[:, 0::2].set(jnp.sin(ang))
    pe = pe.at[:, 1::2].set(jnp.cos(ang))
    return pe


def _choose_rows_per_block(num_rows: int, seq_len: int, row_bytes: int) -> int:
    """Rows per block: multiple of lcm(seq_len, 8) (PE alignment + sublane rule),
    targeting ~_TARGET_BLOCK_BYTES of x per block; full extent for tiny inputs."""
    m = (8 * seq_len) // math.gcd(8, seq_len)          # lcm(seq_len, 8)
    target = max(1, _TARGET_BLOCK_BYTES // max(row_bytes, 1))
    if num_rows <= m or target < m:
        return num_rows                                 # single full-extent block
    return min(num_rows, (min(target, num_rows) // m) * m)


# ---------------- Pallas kernels ----------------

def _add_pe_kernel(x_ref, pe_ref, o_ref):
    # x_ref / pe_ref / o_ref: (TM, D) row blocks; PE block already row-aligned.
    o_ref[...] = (x_ref[...] + pe_ref[...]).astype(o_ref.dtype)


def _add_pe_dropout_kernel(seed_ref, x_ref, pe_ref, o_ref, *, threshold, inv_keep):
    # Inverted dropout with the TPU hardware PRNG. Seeding with (user seed,
    # block id) decorrelates per-block streams.
    pltpu.prng_seed(seed_ref[0], pl.program_id(0))
    y = x_ref[...] + pe_ref[...]
    bits = pltpu.bitcast(pltpu.prng_random_bits(y.shape), jnp.uint32)
    # P(keep) = threshold / 2^32 (sub-1e-9 bias vs keep_prob; threshold is
    # clamped in the wrapper so it never wraps at keep_prob -> 1).
    keep = bits < jnp.uint32(threshold)
    o_ref[...] = jnp.where(keep, y * inv_keep, 0.0).astype(o_ref.dtype)


def _add_pe_scale_kernel(x_ref, pe_ref, scale_ref, o_ref):
    # Portable dropout path: 0-or-1/keep_prob scale precomputed outside the kernel.
    o_ref[...] = ((x_ref[...] + pe_ref[...]) * scale_ref[...]).astype(o_ref.dtype)


# ---------------- wrapper ----------------

def positional_embedding_forward(x, pe, *, dropout_p=DROPOUT_P, training=False,
                                 seed=0, block_rows=None):
    """x: (B, S, D); pe: (seq_len >= S, D). Returns (B, S, D) in x.dtype."""
    B, S, D = x.shape
    num_rows = B * S
    x2 = x.reshape(num_rows, D)

    if block_rows is None:
        block_rows = _choose_rows_per_block(num_rows, S, D * x.dtype.itemsize)
    tm = int(block_rows)
    assert tm == num_rows or (tm % S == 0 and tm % 8 == 0), "bad block_rows"
    grid = (pl.cdiv(num_rows, tm),)

    # PE resident in VMEM: pre-tiled once to exactly one row-block (block starts
    # are multiples of S), constant index_map -> DMA'd once, never re-fetched.
    pe_slice = pe[:S, :].astype(x.dtype)
    reps = max(tm // S, 1)
    pe_tiled = jnp.tile(pe_slice, (reps, 1))[:tm, :]

    x_spec = pl.BlockSpec((tm, D), lambda i: (i, 0))
    pe_spec = pl.BlockSpec((tm, D), lambda i: (0, 0))
    out_spec = pl.BlockSpec((tm, D), lambda i: (i, 0))
    out_shape = jax.ShapeDtypeStruct((num_rows, D), x.dtype)
    cparams = pltpu.CompilerParams(
        dimension_semantics=("parallel",),
        vmem_limit_bytes=_VMEM_LIMIT_BYTES,
    )

    if (not training) or dropout_p <= 0.0:
        # Eval mode: dropout is identity (matches module.eval()).
        # TODO(synk): for production, fuse this add into a neighboring kernel
        # instead of paying a standalone HBM read+write pass over x.
        y2 = pl.pallas_call(
            _add_pe_kernel,
            grid=grid,
            in_specs=[x_spec, pe_spec],
            out_specs=out_spec,
            out_shape=out_shape,
            compiler_params=cparams,
        )(x2, pe_tiled)
        return y2.reshape(B, S, D)

    if dropout_p >= 1.0:
        return jnp.zeros_like(x)

    keep_prob = 1.0 - float(dropout_p)
    inv_keep = 1.0 / keep_prob

    if jax.default_backend() == "tpu":
        # In-kernel dropout via the TPU hardware PRNG: no extra HBM traffic.
        # TODO(synk): PRNG stream differs from torch's nn.Dropout, so the mask is
        # not bit-identical; keep-probability and 1/keep_prob scaling do match.
        threshold = min(int(round(keep_prob * 2.0 ** 32)), 2 ** 32 - 1)
        seed_arr = jnp.asarray([seed], dtype=jnp.int32)
        kernel = functools.partial(_add_pe_dropout_kernel,
                                   threshold=threshold, inv_keep=inv_keep)
        y2 = pl.pallas_call(
            kernel,
            grid=grid,
            in_specs=[
                pl.BlockSpec(memory_space=pltpu.MemorySpace.SMEM),  # seed scalar
                x_spec,
                pe_spec,
            ],
            out_specs=out_spec,
            out_shape=out_shape,
            compiler_params=cparams,
        )(seed_arr, x2, pe_tiled)
        return y2.reshape(B, S, D)

    # Non-TPU backend (pltpu.prng_* has no CPU lowering): precompute the inverted-
    # dropout scale outside and pass it in (costs one extra x-sized HBM read).
    key = jax.random.PRNGKey(seed)
    keep = jax.random.bernoulli(key, p=keep_prob, shape=(num_rows, D))
    scale = keep.astype(x.dtype) * jnp.asarray(inv_keep, dtype=x.dtype)
    y2 = pl.pallas_call(
        _add_pe_scale_kernel,
        grid=grid,
        in_specs=[x_spec, pe_spec, x_spec],
        out_specs=out_spec,
        out_shape=out_shape,
        compiler_params=cparams,
    )(x2, pe_tiled, scale)
    return y2.reshape(B, S, D)


if __name__ == "__main__":
    key = jax.random.PRNGKey(0)
    B, S, D = 2, SEQ_LEN, D_MODEL
    x = jax.random.normal(key, (B, S, D), dtype=jnp.float32)
    pe = make_positional_encoding(SEQ_LEN, D_MODEL)

    # Eval mode: dropout is identity -> must equal x + pe.
    y_eval = jax.block_until_ready(positional_embedding_forward(x, pe, training=False))
    ref = x + pe[None, :S, :]
    assert y_eval.shape == (B, S, D)
    assert jnp.allclose(y_eval, ref, atol=1e-6), "eval-mode mismatch vs reference"

    # Training mode: every output element is either 0 (dropped) or (x+pe)/keep_prob.
    y_train = jax.block_until_ready(
        positional_embedding_forward(x, pe, dropout_p=DROPOUT_P, training=True, seed=0))
    assert y_train.shape == (B, S, D)
    assert bool(jnp.all(jnp.isfinite(y_train)))
    scaled = ref / (1.0 - DROPOUT_P)
    ok = jnp.isclose(y_train, 0.0, atol=1e-6) | jnp.isclose(
        y_train, scaled, rtol=1e-5, atol=1e-5)
    assert bool(jnp.all(ok)), "training outputs are not in {0, (x+pe)/keep_prob}"

    # Lane-dense, multi-block sanity check (D % 128 == 0, grid > 1).
    B2, S2, D2 = 4, 64, 256
    x_big = jax.random.normal(jax.random.PRNGKey(1), (B2, S2, D2), dtype=jnp.float32)
    pe_big = make_positional_encoding(S2, D2)
    y_big = jax.block_until_ready(
        positional_embedding_forward(x_big, pe_big, training=False, block_rows=128))
    assert jnp.allclose(y_big, x_big + pe_big[None, :, :], atol=1e-6)

    print("KERNEL_OK")
</pallas_src>

<mosaic_0001>
module attributes {stable_mosaic.version = 11 : i64} {
  func.func @_add_pe_kernel(%arg0: i32, %arg1: memref<8x4xf32, #tpu.memory_space<vmem>>, %arg2: memref<8x4xf32, #tpu.memory_space<vmem>>, %arg3: memref<8x4xf32, #tpu.memory_space<vmem>>) attributes {dimension_semantics = [#tpu.dimension_semantics<parallel>], iteration_bounds = array<i64: 1>, scalar_prefetch = 0 : i64, scratch_operands = 0 : i64, tpu.core_type = #tpu.core_type<tc>, window_params = [{transform_indices = @transform_0, window_bounds = array<i64: 8, 4>}, {pipeline_mode = #tpu.pipeline_mode<synchronous>, transform_indices = @transform_1, window_bounds = array<i64: 8, 4>}, {transform_indices = @transform_2, window_bounds = array<i64: 8, 4>}]} {
    %c0 = arith.constant 0 : index
    %c0_0 = arith.constant 0 : index
    %0 = vector.load %arg1[%c0, %c0_0] : memref<8x4xf32, #tpu.memory_space<vmem>>, vector<8x4xf32>
    %c0_1 = arith.constant 0 : index
    %c0_2 = arith.constant 0 : index
    %1 = vector.load %arg2[%c0_1, %c0_2] : memref<8x4xf32, #tpu.memory_space<vmem>>, vector<8x4xf32>
    %2 = arith.addf %0, %1 : vector<8x4xf32>
    %c0_3 = arith.constant 0 : index
    %c0_4 = arith.constant 0 : index
    %3 = vector.load %arg3[%c0_3, %c0_4] : memref<8x4xf32, #tpu.memory_space<vmem>>, vector<8x4xf32>
    tpu.vector_store %arg3[%c0_3, %c0_4], %2 {strides = array<i32>} : memref<8x4xf32, #tpu.memory_space<vmem>>, vector<8x4xf32>,
    return
  }
  func.func @transform_0(%arg0: i32) -> (i32, i32) {
    %c0_i32 = arith.constant 0 : i32
    %c0_i32_0 = arith.constant 0 : i32
    return %arg0, %c0_i32 : i32, i32
  }
  func.func @transform_1(%arg0: i32) -> (i32, i32) {
    %c0_i32 = arith.constant 0 : i32
    %c0_i32_0 = arith.constant 0 : i32
    %c0_i32_1 = arith.constant 0 : i32
    return %c0_i32, %c0_i32_0 : i32, i32
  }
  func.func @transform_2(%arg0: i32) -> (i32, i32) {
    %c0_i32 = arith.constant 0 : i32
    %c0_i32_0 = arith.constant 0 : i32
    return %arg0, %c0_i32 : i32, i32
  }
}

</mosaic_0001>

<llo_original>
// kernel: tpu_custom_call.1
$region0: #{tpu_custom_call.1}
  #allocation0 [shape = 'u32[]', space=smem, size = 0x4, offset = 0x4, fixed_abs, tag = 'smem constant byte address 0x4 - core index']
  #allocation1 [shape = 'u32[72,128]{1,0:T(1,128)}', space=vmem, size = 0x9000, scoped, tag = 'internal scratch']
  %s0 = inlined_call_operand.vmem [shape: f32[8,4], index: 0, kind: input, shape index: {}]
  %s1 = inlined_call_operand.vmem [shape: f32[8,4], index: 1, kind: input, shape index: {}]
  %s2 = inlined_call_operand.vmem [shape: f32[8,4], index: 2, kind: output, shape index: {}]
  %s3 = sld [smem:[#allocation0]]
  $region18: #{tpu_custom_call.1} parent=0
    _
  %s5 = ssub.s32 1, %s3
  %s6 = scalar_select 0, %s5, %s3
  // Predicated region
  $region2: #{tpu_custom_call.1} parent=0 // pred_check
    _
  $region3: #{tpu_custom_call.1} parent=0 // pred_check_branch
    %8 = sbr.rel (0) target = $region5
  $region4: #{tpu_custom_call.1} parent=0 // pred_region
    _
  $region5: #{tpu_custom_call.1} parent=0 // pred_fallthru
    _
  // Predicated region
  $region6: #{tpu_custom_call.1} parent=0 // pred_check
    _
  $region7: #{tpu_custom_call.1} parent=0 // pred_check_branch
    %10 = sbr.rel (0) target = $region9
  $region8: #{tpu_custom_call.1} parent=0 // pred_region
    _
  $region9: #{tpu_custom_call.1} parent=0 // pred_fallthru
    _
  %v11 = vld [vmem:[%s0] sm:$0xff]
  %v12 = vld [vmem:[%s1] sm:$0xff]
  %v13 = vadd.f32 %v11, %v12
  %vm14 = vcmask 31744
  %15 = vst.msk [vmem:[%s2] sm:$0xff] %vm14, %v13
  // Predicated region
  $region10: #{tpu_custom_call.1} parent=0 // pred_check
    _
  $region11: #{tpu_custom_call.1} parent=0 // pred_check_branch
    %17 = sbr.rel (0) target = $region13
  $region12: #{tpu_custom_call.1} parent=0 // pred_region
    _
  $region13: #{tpu_custom_call.1} parent=0 // pred_fallthru
    _
  // Predicated region
  $region14: #{tpu_custom_call.1} parent=0 // pred_check
    _
  $region15: #{tpu_custom_call.1} parent=0 // pred_check_branch
    %19 = sbr.rel (0) target = $region17
  $region16: #{tpu_custom_call.1} parent=0 // pred_region
    _
  $region17: #{tpu_custom_call.1} parent=0 // pred_fallthru
    _

</llo_original>
